<compile_context>
chip_gen: v5e
topology: v5e:2x2
jax: 0.10.0
libtpu: 0.0.40
codegen_flags: <defaults>
</compile_context>

<pallas_src>
import jax
import jax.numpy as jnp
from jax import lax
from jax.experimental import pallas as pl
from jax.experimental.pallas import tpu as pltpu


def _round_up(x, m):
    return (x + m - 1) // m * m


# ----------------------------- Pallas kernel -------------------------------

def _make_conv_bn_relu_kernel(kh, wr, tile_p):
    """Fused conv+BN+ReLU kernel for a 'same'-style stride-1 conv.

    Per grid step (image n, spatial tile pt):
      out[co, p] = relu( sum_{ki} sum_m W[ki, co, m] * xw[p0 + p + ki*Wr, m] + shift[co] )
    where xw is the width-packed (kw folded into the channel axis, K = kw*Cin) zero-padded
    image flattened with row stride Wr (a multiple of 8, so ki*Wr tap offsets are 8-aligned).
    """

    def kernel(x_ref, w_ref, shift_ref, o_ref):
        # x_ref:     (S_pad, K)    bf16  width-packed, zero-padded image (resident per image)
        # w_ref:     (kh, CP, K)   bf16  BN-scale-folded per-row-tap weights (resident)
        # shift_ref: (CP, 1)       f32   folded BN shift (resident)
        # o_ref:     (CP, tile_p)  bf16  channel-major output tile (spatial axis in lanes)
        cp = o_ref.shape[0]
        p0 = pl.program_id(1) * tile_p                   # tile_p is a multiple of 128
        acc = jnp.zeros((cp, tile_p), jnp.float32)
        for ki in range(kh):                             # kh (=3) aligned taps, K = kw*Cin each
            start = pl.multiple_of(p0 + ki * wr, 8)      # 8-sublane aligned: no relayout copy
            xs = x_ref[pl.ds(start, tile_p), :]          # (tile_p, K) bf16
            acc = acc + lax.dot_general(
                w_ref[ki], xs,
                dimension_numbers=(((1,), (1,)), ((), ())),
                preferred_element_type=jnp.float32)
        y = acc + shift_ref[...]                         # (CP, 1) broadcasts across lanes
        o_ref[...] = jnp.maximum(y, 0.0).astype(o_ref.dtype)

    return kernel


# ------------------------------- JAX glue -----------------------------------

def basic_conv2d_forward(x_nchw, conv_w, gamma, beta, run_mean, run_var,
                         *, eps=1e-3, padding=1):
    """Pallas equivalent of BasicConv2d.forward (stride=1, eval-mode BN)."""
    N, Cin, H, W = x_nchw.shape
    Cout, Cin_w, kh, kw = conv_w.shape
    assert Cin_w == Cin
    # TODO(synk): stride is fixed at 1 (the configuration this instance uses); strided variants
    # need a strided width-pack on the host.

    Hp, Wp = H + 2 * padding, W + 2 * padding
    Hout, Wout = Hp - kh + 1, Wp - kw + 1                # stride-1 output size

    wr = _round_up(Wout, 8)          # row stride: makes every ki*wr tap offset 8-aligned
    K = kw * Cin                     # contraction size after width-packing
    cp = _round_up(Cout, 8)          # channels live in sublanes: 8-granule
    p_valid = Hout * wr              # valid flattened output positions (junk cols < 8/wr)

    # Spatial tile: multiple of 128 lanes, accumulator (cp, tile_p, f32) well inside vregs,
    # and at least 2 grid steps in total so both v7x TensorCores get work.
    acc_budget = 128 * 1024
    tile_p = max(128, min(1024, (acc_budget // (cp * 4)) // 128 * 128))
    tile_p = min(tile_p, _round_up(p_valid, 128))
    if N == 1:
        tile_p = min(tile_p, max(128, (_round_up(p_valid, 128) // 2) // 128 * 128))
    p_pad = _round_up(p_valid, tile_p)
    n_pt = p_pad // tile_p
    s_pad = p_pad + (kh - 1) * wr                        # tap tails land in zero padding

    # ---- fold eval-mode BN into the conv weight (scale) and a per-channel shift ----
    inv = (gamma / jnp.sqrt(run_var + eps)).astype(jnp.float32)           # [Cout]
    w_fold = conv_w.astype(jnp.float32) * inv[:, None, None, None]        # [Cout,Cin,kh,kw]
    shift = (beta - run_mean * inv).astype(jnp.float32)                   # [Cout]

    # per-row-tap weights: [kh, CP, kw*Cin], bf16 (BN scale folded in f32 first)
    w_taps = jnp.transpose(w_fold, (2, 0, 3, 1)).reshape(kh, Cout, K)
    w_taps = jnp.pad(w_taps, ((0, 0), (0, cp - Cout), (0, 0))).astype(jnp.bfloat16)
    shift_p = jnp.pad(shift, (0, cp - Cout)).reshape(cp, 1)               # f32

    # ---- width-only host im2col: pack kw into the channel/lane axis (kw x input bytes) ----
    # TODO(synk): the NCHW->NHWC transpose remains only because the module interface is NCHW;
    # in an NHWC pipeline it disappears.
    x_nhwc = jnp.transpose(x_nchw, (0, 2, 3, 1))
    xp = jnp.pad(x_nhwc, ((0, 0), (padding, padding), (padding, padding), (0, 0)))
    xw = jnp.concatenate([xp[:, :, kj:kj + Wout, :] for kj in range(kw)], axis=-1)  # [N,Hp,Wout,K]
    xw = jnp.pad(xw, ((0, 0), (0, 0), (0, wr - Wout), (0, 0)))                      # row stride wr
    xf = xw.reshape(N, Hp * wr, K)
    xf = jnp.pad(xf, ((0, 0), (0, s_pad - Hp * wr), (0, 0))).astype(jnp.bfloat16)

    kernel = _make_conv_bn_relu_kernel(kh, wr, tile_p)

    out = pl.pallas_call(
        kernel,
        out_shape=jax.ShapeDtypeStruct((N, cp, p_pad), jnp.bfloat16),     # bf16 stores
        grid_spec=pltpu.PrefetchScalarGridSpec(
            num_scalar_prefetch=0,
            grid=(N, n_pt),                              # image x spatial tile, both parallel
            in_specs=[
                # whole-image slab; index_map ignores pt -> fetched once per image, resident
                # across the inner spatial axis.
                # TODO(synk): for stem-sized spatial extents (299x299) this slab should itself
                # be row-tiled with a halo to stay inside v7x's 64 MiB VMEM.
                pl.BlockSpec((None, s_pad, K), lambda n, pt: (n, 0, 0)),
                pl.BlockSpec((kh, cp, K), lambda n, pt: (0, 0, 0)),       # resident weights
                pl.BlockSpec((cp, 1), lambda n, pt: (0, 0)),              # resident shift
            ],
            out_specs=pl.BlockSpec((None, cp, tile_p), lambda n, pt: (n, 0, pt)),
        ),
        compiler_params=pltpu.CompilerParams(
            dimension_semantics=("parallel", "parallel"),
            vmem_limit_bytes=32 * 1024 * 1024,
        ),
    )(xf, w_taps, shift_p)

    # TODO(synk): in a fused pipeline the consumer would read the padded (CP, Hout, wr) layout
    # directly via its own BlockSpec; the crop below exists only for the standalone NCHW
    # interface and is a pure reshape whenever Cout % 8 == 0 and Wout % 8 == 0 (as here).
    out = out[:, :Cout, :p_valid].reshape(N, Cout, Hout, wr)[:, :, :, :Wout]
    return out


# ------------------------------ references -----------------------------------

def _reference_f32(x, conv_w, gamma, beta, run_mean, run_var, *, eps=1e-3, padding=1):
    """Exact eval-mode module semantics in f32 (loose sanity check vs bf16 kernel)."""
    y = lax.conv_general_dilated(
        x, conv_w, window_strides=(1, 1),
        padding=[(padding, padding), (padding, padding)],
        dimension_numbers=("NCHW", "OIHW", "NCHW"),
        precision=lax.Precision.HIGHEST)
    inv = gamma / jnp.sqrt(run_var + eps)
    y = y * inv[None, :, None, None] + (beta - run_mean * inv)[None, :, None, None]
    return jnp.maximum(y, 0.0)


def _reference_bf16_quantized(x, conv_w, gamma, beta, run_mean, run_var, *, eps=1e-3, padding=1):
    """Same math as the kernel (bf16-rounded inputs and BN-folded bf16 weights, f32 accum)."""
    inv = gamma / jnp.sqrt(run_var + eps)
    w_q = (conv_w * inv[:, None, None, None]).astype(jnp.bfloat16).astype(jnp.float32)
    x_q = x.astype(jnp.bfloat16).astype(jnp.float32)
    y = lax.conv_general_dilated(
        x_q, w_q, window_strides=(1, 1),
        padding=[(padding, padding), (padding, padding)],
        dimension_numbers=("NCHW", "OIHW", "NCHW"),
        precision=lax.Precision.HIGHEST)
    y = y + (beta - run_mean * inv)[None, :, None, None]
    return jnp.maximum(y, 0.0)


# --------------------------------- main --------------------------------------

if __name__ == "__main__":
    key = jax.random.PRNGKey(0)
    k_x, k_w, k_g, k_b, k_m, k_v = jax.random.split(key, 6)

    N, Cin, H, W = 2, 4, 16, 16
    Cout, kh, kw = 8, 3, 3

    x = jax.random.normal(k_x, (N, Cin, H, W), dtype=jnp.float32)
    conv_w = 0.1 * jax.random.normal(k_w, (Cout, Cin, kh, kw), dtype=jnp.float32)
    gamma = 1.0 + 0.1 * jax.random.normal(k_g, (Cout,), dtype=jnp.float32)
    beta = 0.1 * jax.random.normal(k_b, (Cout,), dtype=jnp.float32)
    run_mean = 0.1 * jax.random.normal(k_m, (Cout,), dtype=jnp.float32)
    run_var = jnp.abs(1.0 + 0.1 * jax.random.normal(k_v, (Cout,), dtype=jnp.float32))

    out = jax.block_until_ready(
        basic_conv2d_forward(x, conv_w, gamma, beta, run_mean, run_var))
    assert out.shape == (N, Cout, H, W)
    assert out.dtype == jnp.bfloat16
    out_f32 = out.astype(jnp.float32)

    # Tight check: same bf16 quantization of inputs/folded-weights as the kernel
    # (tolerance also covers the bf16 rounding of the kernel's output store).
    ref_q = jax.block_until_ready(
        _reference_bf16_quantized(x, conv_w, gamma, beta, run_mean, run_var))
    assert jnp.allclose(out_f32, ref_q, atol=1e-2, rtol=1e-2), "mismatch vs bf16-quantized reference"

    # Loose check: full-precision module semantics.
    ref = jax.block_until_ready(
        _reference_f32(x, conv_w, gamma, beta, run_mean, run_var))
    assert jnp.allclose(out_f32, ref, atol=1e-1, rtol=5e-2), "mismatch vs f32 module reference"

    print("KERNEL_OK")
</pallas_src>

<mosaic_0001>
module attributes {stable_mosaic.version = 11 : i64} {
  func.func @kernel(%arg0: i32, %arg1: i32, %arg2: memref<1x288x12xbf16, #tpu.memory_space<vmem>>, %arg3: memref<3x8x12xbf16, #tpu.memory_space<vmem>>, %arg4: memref<8x1xf32, #tpu.memory_space<vmem>>, %arg5: memref<1x8x256xbf16, #tpu.memory_space<vmem>>) attributes {dimension_semantics = [#tpu.dimension_semantics<parallel>, #tpu.dimension_semantics<parallel>], iteration_bounds = array<i64: 2, 1>, scalar_prefetch = 0 : i64, scratch_operands = 0 : i64, tpu.core_type = #tpu.core_type<tc>, window_params = [{transform_indices = @transform_0, window_bounds = array<i64: 1, 288, 12>}, {pipeline_mode = #tpu.pipeline_mode<synchronous>, transform_indices = @transform_1, window_bounds = array<i64: 3, 8, 12>}, {pipeline_mode = #tpu.pipeline_mode<synchronous>, transform_indices = @transform_2, window_bounds = array<i64: 8, 1>}, {transform_indices = @transform_3, window_bounds = array<i64: 1, 8, 256>}]} {
    %c256_i32 = arith.constant 256 : i32
    %0 = arith.muli %arg1, %c256_i32 : i32
    %cst = arith.constant 0.000000e+00 : f32
    %1 = vector.broadcast %cst : f32 to vector<8x256xf32>
    %c0_i32 = arith.constant 0 : i32
    %2 = arith.addi %0, %c0_i32 : i32
    %3 = tpu.assume_multiple %2, 8 : i32
    %c0 = arith.constant 0 : index
    %4 = arith.index_cast %3 : i32 to index
    %c0_0 = arith.constant 0 : index
    %5 = vector.load %arg2[%c0, %4, %c0_0] : memref<1x288x12xbf16, #tpu.memory_space<vmem>>, vector<1x256x12xbf16>
    %6 = vector.shape_cast %5 : vector<1x256x12xbf16> to vector<256x12xbf16>
    %c0_1 = arith.constant 0 : index
    %c0_2 = arith.constant 0 : index
    %c0_3 = arith.constant 0 : index
    %7 = vector.load %arg3[%c0_1, %c0_2, %c0_3] : memref<3x8x12xbf16, #tpu.memory_space<vmem>>, vector<1x8x12xbf16>
    %8 = vector.shape_cast %7 : vector<1x8x12xbf16> to vector<8x12xbf16>
    %cst_4 = arith.constant dense<0.000000e+00> : vector<8x256xf32>
    %9 = tpu.matmul %8, %6, %cst_4 {dimension_numbers = #tpu.dot_dimension_numbers<[1], [1], [0], [0], [0, 0, 1, 0], [], []>} : vector<8x12xbf16>, vector<256x12xbf16>, vector<8x256xf32> -> vector<8x256xf32>
    %10 = arith.addf %1, %9 : vector<8x256xf32>
    %c16_i32 = arith.constant 16 : i32
    %11 = arith.addi %0, %c16_i32 : i32
    %12 = tpu.assume_multiple %11, 8 : i32
    %c0_5 = arith.constant 0 : index
    %13 = arith.index_cast %12 : i32 to index
    %c0_6 = arith.constant 0 : index
    %14 = vector.load %arg2[%c0_5, %13, %c0_6] : memref<1x288x12xbf16, #tpu.memory_space<vmem>>, vector<1x256x12xbf16>
    %15 = vector.shape_cast %14 : vector<1x256x12xbf16> to vector<256x12xbf16>
    %c1 = arith.constant 1 : index
    %c0_7 = arith.constant 0 : index
    %c0_8 = arith.constant 0 : index
    %16 = vector.load %arg3[%c1, %c0_7, %c0_8] : memref<3x8x12xbf16, #tpu.memory_space<vmem>>, vector<1x8x12xbf16>
    %17 = vector.shape_cast %16 : vector<1x8x12xbf16> to vector<8x12xbf16>
    %cst_9 = arith.constant dense<0.000000e+00> : vector<8x256xf32>
    %18 = tpu.matmul %17, %15, %cst_9 {dimension_numbers = #tpu.dot_dimension_numbers<[1], [1], [0], [0], [0, 0, 1, 0], [], []>} : vector<8x12xbf16>, vector<256x12xbf16>, vector<8x256xf32> -> vector<8x256xf32>
    %19 = arith.addf %10, %18 : vector<8x256xf32>
    %c32_i32 = arith.constant 32 : i32
    %20 = arith.addi %0, %c32_i32 : i32
    %21 = tpu.assume_multiple %20, 8 : i32
    %c0_10 = arith.constant 0 : index
    %22 = arith.index_cast %21 : i32 to index
    %c0_11 = arith.constant 0 : index
    %23 = vector.load %arg2[%c0_10, %22, %c0_11] : memref<1x288x12xbf16, #tpu.memory_space<vmem>>, vector<1x256x12xbf16>
    %24 = vector.shape_cast %23 : vector<1x256x12xbf16> to vector<256x12xbf16>
    %c2 = arith.constant 2 : index
    %c0_12 = arith.constant 0 : index
    %c0_13 = arith.constant 0 : index
    %25 = vector.load %arg3[%c2, %c0_12, %c0_13] : memref<3x8x12xbf16, #tpu.memory_space<vmem>>, vector<1x8x12xbf16>
    %26 = vector.shape_cast %25 : vector<1x8x12xbf16> to vector<8x12xbf16>
    %cst_14 = arith.constant dense<0.000000e+00> : vector<8x256xf32>
    %27 = tpu.matmul %26, %24, %cst_14 {dimension_numbers = #tpu.dot_dimension_numbers<[1], [1], [0], [0], [0, 0, 1, 0], [], []>} : vector<8x12xbf16>, vector<256x12xbf16>, vector<8x256xf32> -> vector<8x256xf32>
    %28 = arith.addf %19, %27 : vector<8x256xf32>
    %c0_15 = arith.constant 0 : index
    %c0_16 = arith.constant 0 : index
    %29 = vector.load %arg4[%c0_15, %c0_16] : memref<8x1xf32, #tpu.memory_space<vmem>>, vector<8x1xf32>
    %30 = vector.broadcast %29 : vector<8x1xf32> to vector<8x256xf32>
    %31 = arith.addf %28, %30 : vector<8x256xf32>
    %cst_17 = arith.constant 0.000000e+00 : f32
    %32 = vector.broadcast %cst_17 : f32 to vector<8x256xf32>
    %33 = arith.maximumf %31, %32 : vector<8x256xf32>
    %34 = arith.truncf %33 : vector<8x256xf32> to vector<8x256xbf16>
    %c0_18 = arith.constant 0 : index
    %c0_19 = arith.constant 0 : index
    %c0_20 = arith.constant 0 : index
    %35 = vector.load %arg5[%c0_18, %c0_19, %c0_20] : memref<1x8x256xbf16, #tpu.memory_space<vmem>>, vector<1x8x256xbf16>
    %36 = vector.shape_cast %35 : vector<1x8x256xbf16> to vector<8x256xbf16>
    %37 = vector.shape_cast %34 : vector<8x256xbf16> to vector<1x8x256xbf16>
    tpu.vector_store %arg5[%c0_18, %c0_19, %c0_20], %37 {strides = array<i32>} : memref<1x8x256xbf16, #tpu.memory_space<vmem>>, vector<1x8x256xbf16>,
    return
  }
  func.func @transform_0(%arg0: i32, %arg1: i32) -> (i32, i32, i32) {
    %c0_i32 = arith.constant 0 : i32
    %c0_i32_0 = arith.constant 0 : i32
    %c0_i32_1 = arith.constant 0 : i32
    return %arg0, %c0_i32, %c0_i32_0 : i32, i32, i32
  }
  func.func @transform_1(%arg0: i32, %arg1: i32) -> (i32, i32, i32) {
    %c0_i32 = arith.constant 0 : i32
    %c0_i32_0 = arith.constant 0 : i32
    %c0_i32_1 = arith.constant 0 : i32
    %c0_i32_2 = arith.constant 0 : i32
    return %c0_i32, %c0_i32_0, %c0_i32_1 : i32, i32, i32
  }
  func.func @transform_2(%arg0: i32, %arg1: i32) -> (i32, i32) {
    %c0_i32 = arith.constant 0 : i32
    %c0_i32_0 = arith.constant 0 : i32
    %c0_i32_1 = arith.constant 0 : i32
    return %c0_i32, %c0_i32_0 : i32, i32
  }
  func.func @transform_3(%arg0: i32, %arg1: i32) -> (i32, i32, i32) {
    %c0_i32 = arith.constant 0 : i32
    %c0_i32_0 = arith.constant 0 : i32
    return %arg0, %c0_i32, %arg1 : i32, i32, i32
  }
}

</mosaic_0001>

<llo_original>
// kernel: tpu_custom_call.1
$region0: #{tpu_custom_call.1}
  #allocation0 [shape = 'u32[]', space=smem, size = 0x4, offset = 0x4, fixed_abs, tag = 'smem constant byte address 0x4 - core index']
  #allocation1 [shape = 'u32[72,128]{1,0:T(1,128)}', space=vmem, size = 0x9000, scoped, tag = 'internal scratch']
  %s0 = inlined_call_operand.vmem [shape: bf16[2,288,12], index: 0, kind: input, shape index: {}]
  %s1 = inlined_call_operand.vmem [shape: bf16[3,8,12], index: 1, kind: input, shape index: {}]
  %s2 = inlined_call_operand.vmem [shape: f32[8,1], index: 2, kind: input, shape index: {}]
  %s3 = inlined_call_operand.hbm [shape: bf16[2,8,256], index: 3, kind: output, shape index: {}]
  %s4 = sld [smem:[#allocation0]]
  $region45: #{tpu_custom_call.1} parent=0
    _
  %s6 = ssub.s32 1, %s4
  %s7 = scalar_select 0, %s6, %s4
  $region1: #{tpu_custom_call.1} parent=0
    #allocation2 [shape = 'u8[8192]{0}', space=vmem, size = 0x2000, scoped, tag = 'output window, operand 0']
    #allocation3 [shape = 's32[2]{0}', space=sflag, size = 0x8, scoped, tag = 'scoped memory for tpu_custom_call.1']
    %8 = vsyncpa [#allocation3], 0
    %s9 = scalar_lea.sflag [#allocation3], 1
    %10 = vsyncpa %s9, 0
    loop: start=0, step=1, limit=4
    $region2: #{tpu_custom_call.1} parent=1 // loop_pre_header
      _
    $region3: #{tpu_custom_call.1} parent=1 // loop_header
      %s12 = sphi 0, %s16
      %p13 = scmp.ge.s32.totalorder %s12, 4
      %s19 = sphi 0, %s31
      %s20 = sphi 0, %s27
      %s21 = sphi 0, %s19
      %s22 = sphi 0, %s20
      %s23 = sphi 0, %s21
      %s24 = sphi 0, %s22
      %s34 = sphi 0, %s36
      %s37 = sphi 0, %s34
      %s38 = sphi 0, %s37
      %s54 = sphi 0, %s38
      %s58 = sphi 0, %s58
      %s60 = sphi 0, %s58
      %s61 = sphi 0, %s60
      %s75 = sphi 0, %s61
      %s79 = sphi 0, %s79
      %s81 = sphi 0, %s79
      %s82 = sphi 0, %s81
      %s96 = sphi 0, %s82
      %s104 = sphi 0, %s106
      %s107 = sphi 0, %s104
      %s108 = sphi 0, %s107
      %s124 = sphi 0, %s108
    $region4: #{tpu_custom_call.1} parent=1 // loop_header_branch
      %15 = sbr.rel (%p13) target = $region8
    $region5: #{tpu_custom_call.1} parent=1 // loop_body
      %s17 = ssub.s32 %s12, 1
      %s18 = ssub.s32 %s12, 2
      %s25 = sadd.s32 1, %s20
      %p26 = scmp.ge.s32.totalorder %s25, 1
      %s27 = scalar_select %p26, 0, %s25
      %s28 = sadd.s32 1, %s19
      %s29 = scalar_select %p26, %s28, %s19
      %p30 = scmp.ge.s32.totalorder %s29, 2
      %s31 = scalar_select %p30, 0, %s29
      %s32 = ssub.s32 %s19, %s31
      %p33 = scmp.eq.s32.totalorder %s32, 0
      %s35 = sadd.s32 %s34, 1
      %s36 = scalar_select %p33, %s34, %s35
      %p39 = pneg %p33
      %p40 = scmp.eq.s32.totalorder %s12, 1
      %p41 = por %p39, %p40
      %p42 = scmp.ne.s32.totalorder %s34, %s37
      %p43 = scmp.eq.s32.totalorder %s12, 0
      %p44 = por %p42, %p43
      %p45 = scmp.ne.s32.totalorder %s34, %s37
      %p46 = scmp.eq.s32.totalorder %s17, 1
      %p47 = por %p45, %p46
      %p48 = scmp.ne.s32.totalorder %s37, %s38
      %p49 = scmp.eq.s32.totalorder %s17, 0
      %p50 = por %p48, %p49
      %p51 = scmp.ne.s32.totalorder %s37, %s38
      %p52 = scmp.eq.s32.totalorder %s18, 1
      %p53 = por %p51, %p52
      %p55 = scmp.ne.s32.totalorder %s38, %s54
      %p56 = scmp.eq.s32.totalorder %s18, 0
      %p57 = por %p55, %p56
      %s59 = sadd.s32 %s58, 1
      %p62 = scmp.eq.s32.totalorder %s12, 1
      %p63 = scmp.ne.s32.totalorder %s58, %s60
      %p64 = scmp.eq.s32.totalorder %s12, 0
      %p65 = por %p63, %p64
      %p66 = scmp.ne.s32.totalorder %s58, %s60
      %p67 = scmp.eq.s32.totalorder %s17, 1
      %p68 = por %p66, %p67
      %p69 = scmp.ne.s32.totalorder %s60, %s61
      %p70 = scmp.eq.s32.totalorder %s17, 0
      %p71 = por %p69, %p70
      %p72 = scmp.ne.s32.totalorder %s60, %s61
      %p73 = scmp.eq.s32.totalorder %s18, 1
      %p74 = por %p72, %p73
      %p76 = scmp.ne.s32.totalorder %s61, %s75
      %p77 = scmp.eq.s32.totalorder %s18, 0
      %p78 = por %p76, %p77
      %s80 = sadd.s32 %s79, 1
      %p83 = scmp.eq.s32.totalorder %s12, 1
      %p84 = scmp.ne.s32.totalorder %s79, %s81
      %p85 = scmp.eq.s32.totalorder %s12, 0
      %p86 = por %p84, %p85
      %p87 = scmp.ne.s32.totalorder %s79, %s81
      %p88 = scmp.eq.s32.totalorder %s17, 1
      %p89 = por %p87, %p88
      %p90 = scmp.ne.s32.totalorder %s81, %s82
      %p91 = scmp.eq.s32.totalorder %s17, 0
      %p92 = por %p90, %p91
      %p93 = scmp.ne.s32.totalorder %s81, %s82
      %p94 = scmp.eq.s32.totalorder %s18, 1
      %p95 = por %p93, %p94
      %p97 = scmp.ne.s32.totalorder %s82, %s96
      %p98 = scmp.eq.s32.totalorder %s18, 0
      %p99 = por %p97, %p98
      %s100 = ssub.s32 %s19, %s31
      %s101 = ssub.s32 %s20, %s27
      %s102 = sor.u32 %s100, %s101
      %p103 = scmp.eq.s32.totalorder %s102, 0
      %s105 = sadd.s32 %s104, 1
      %s106 = scalar_select %p103, %s104, %s105
      %p109 = pneg %p103
      %p110 = scmp.eq.s32.totalorder %s12, 1
      %p111 = por %p109, %p110
      %p112 = scmp.ne.s32.totalorder %s104, %s107
      %p113 = scmp.eq.s32.totalorder %s12, 0
      %p114 = por %p112, %p113
      %p115 = scmp.ne.s32.totalorder %s104, %s107
      %p116 = scmp.eq.s32.totalorder %s17, 1
      %p117 = por %p115, %p116
      %p118 = scmp.ne.s32.totalorder %s107, %s108
      %p119 = scmp.eq.s32.totalorder %s17, 0
      %p120 = por %p118, %p119
      %p121 = scmp.ne.s32.totalorder %s107, %s108
      %p122 = scmp.eq.s32.totalorder %s18, 1
      %p123 = por %p121, %p122
      %p125 = scmp.ne.s32.totalorder %s108, %s124
      %p126 = scmp.eq.s32.totalorder %s18, 0
      %p127 = por %p125, %p126
      %p128 = scmp.le.s32.totalorder 1, %s12
      %p129 = scmp.lt.s32.totalorder %s12, 3
      %p130 = pnand %p128, %p129
      %p131 = pneg %p130
      // Predicated region
      $region9: #{tpu_custom_call.1} parent=5 // pred_check
        _
      $region10: #{tpu_custom_call.1} parent=5 // pred_check_branch
        %133 = sbr.rel (%p130) target = $region12
      $region11: #{tpu_custom_call.1} parent=5 // pred_region
        %s134 = ssub.s32 %s12, 1
        // Predicated region
        $region13: #{tpu_custom_call.1} parent=11 // pred_check
          %p135 = pneg %p71
        $region14: #{tpu_custom_call.1} parent=11 // pred_check_branch
          %137 = sbr.rel (%p135) target = $region16
        $region15: #{tpu_custom_call.1} parent=11 // pred_region
          _
        $region16: #{tpu_custom_call.1} parent=11 // pred_fallthru
          _
        // Predicated region
        $region17: #{tpu_custom_call.1} parent=11 // pred_check
          %p138 = pneg %p92
        $region18: #{tpu_custom_call.1} parent=11 // pred_check_branch
          %140 = sbr.rel (%p138) target = $region20
        $region19: #{tpu_custom_call.1} parent=11 // pred_region
          _
        $region20: #{tpu_custom_call.1} parent=11 // pred_fallthru
          _
      $region12: #{tpu_custom_call.1} parent=5 // pred_fallthru
        _
      %p141 = scmp.lt.s32.totalorder %s12, 2
      // Predicated region
      $region21: #{tpu_custom_call.1} parent=5 // pred_check
        %p142 = pneg %p141
      $region22: #{tpu_custom_call.1} parent=5 // pred_check_branch
        %144 = sbr.rel (%p142) target = $region24
      $region23: #{tpu_custom_call.1} parent=5 // pred_region
        // Predicated region
        $region25: #{tpu_custom_call.1} parent=23 // pred_check
          %p145 = pneg %p44
        $region26: #{tpu_custom_call.1} parent=23 // pred_check_branch
          %147 = sbr.rel (%p145) target = $region28
        $region27: #{tpu_custom_call.1} parent=23 // pred_region
          %p148 = scmp.lt.s32.totalorder %s19, 1
          %s149 = scalar_select %p148, %s19, 1
          %s150 = smul.addr %s149, 36
          %s151 = smul.addr %s150, 4
          %s152 = scalar_lea.vmem %s0, %s151
        $region28: #{tpu_custom_call.1} parent=23 // pred_fallthru
          _
      $region24: #{tpu_custom_call.1} parent=5 // pred_fallthru
        _
      %p153 = scmp.le.s32.totalorder 1, %s12
      %p154 = scmp.lt.s32.totalorder %s12, 3
      %p155 = pnand %p153, %p154
      %p156 = pneg %p155
      // Predicated region
      $region29: #{tpu_custom_call.1} parent=5 // pred_check
        _
      $region30: #{tpu_custom_call.1} parent=5 // pred_check_branch
        %158 = sbr.rel (%p155) target = $region32
      $region31: #{tpu_custom_call.1} parent=5 // pred_region
        %s159 = ssub.s32 %s12, 1
        %p160 = scmp.lt.s32.totalorder %s21, 1
        %s161 = scalar_select %p160, %s21, 1
        %s162 = smul.addr %s161, 36
        %s163 = smul.addr %s162, 4
        %s164 = scalar_lea.vmem %s0, %s163
        %p165 = pneg %p50
        %p166 = pneg %p47
        %p167 = pneg %p71
        %p168 = pneg %p68
        %p169 = pneg %p92
        %p170 = pneg %p89
        %p171 = pneg %p120
        %p172 = pneg %p117
        %s173 = sand.u32 %s107, 1
        %s174 = scalar_lea.sflag [#allocation3], %s173
        %s175 = sand.u32 %s107, 1
        %s176 = smul.addr %s175, 8
        %s177 = scalar_lea.vmem [#allocation2], %s176
        %p178 = scmp.lt.s32.totalorder %s21, 1
        %s179 = scalar_select %p178, %s21, 1
        %s180 = smul.addr %s179, 36
        %s181 = smul.addr %s180, 4
        %s182 = scalar_lea.vmem %s0, %s181
        %s183 = smul.u32 2, %s22
        %s184 = smul.u32 %s22, 256
        %s185 = sshra.s32 %s184, 3
        %s186 = sand.u32 %s184, 7
        %s187 = smul.addr %s185, 4
        %s188 = scalar_lea.vmem %s182, %s187
        %v189 = vld [vmem:[%s188] sm:$0xf]
        %v190 = vld [vmem:[%s188 + $0x4] sm:$0xf]
        %v191 = vld [vmem:[%s188 + $0x8] sm:$0xf]
        %v192 = vld [vmem:[%s188 + $0xc] sm:$0xf]
        %v193 = vld [vmem:[%s188 + $0x10] sm:$0xf]
        %v194 = vld [vmem:[%s188 + $0x14] sm:$0xf]
        %v195 = vld [vmem:[%s188 + $0x18] sm:$0xf]
        %v196 = vld [vmem:[%s188 + $0x1c] sm:$0xf]
        %v197 = vld [vmem:[%s188 + $0x20] sm:$0xf]
        %v198 = vld [vmem:[%s188 + $0x24] sm:$0xf]
        %v199 = vld [vmem:[%s188 + $0x28] sm:$0xf]
        %v200 = vld [vmem:[%s188 + $0x2c] sm:$0xf]
        %v201 = vld [vmem:[%s188 + $0x30] sm:$0xf]
        %v202 = vld [vmem:[%s188 + $0x34] sm:$0xf]
        %v203 = vld [vmem:[%s188 + $0x38] sm:$0xf]
        %v204 = vld [vmem:[%s188 + $0x3c] sm:$0xf]
        %v205 = vld [vmem:[%s188 + $0x40] sm:$0xf]
        %v206 = vld [vmem:[%s188 + $0x44] sm:$0xf]
        %v207 = vld [vmem:[%s188 + $0x48] sm:$0xf]
        %v208 = vld [vmem:[%s188 + $0x4c] sm:$0xf]
        %v209 = vld [vmem:[%s188 + $0x50] sm:$0xf]
        %v210 = vld [vmem:[%s188 + $0x54] sm:$0xf]
        %v211 = vld [vmem:[%s188 + $0x58] sm:$0xf]
        %v212 = vld [vmem:[%s188 + $0x5c] sm:$0xf]
        %v213 = vld [vmem:[%s188 + $0x60] sm:$0xf]
        %v214 = vld [vmem:[%s188 + $0x64] sm:$0xf]
        %v215 = vld [vmem:[%s188 + $0x68] sm:$0xf]
        %v216 = vld [vmem:[%s188 + $0x6c] sm:$0xf]
        %v217 = vld [vmem:[%s188 + $0x70] sm:$0xf]
        %v218 = vld [vmem:[%s188 + $0x74] sm:$0xf]
        %v219 = vld [vmem:[%s188 + $0x78] sm:$0xf]
        %v220 = vld [vmem:[%s188 + $0x7c] sm:$0xf]
        %v221 = vld [vmem:[%s1] sm:$0xf]
        %s222 = sadd.s32 %s184, 16
        %s223 = sshra.s32 %s222, 3
        %s224 = sand.u32 %s222, 7
        %s225 = smul.addr %s223, 4
        %s226 = scalar_lea.vmem %s182, %s225
        %v227 = vld [vmem:[%s226] sm:$0xf]
        %v228 = vld [vmem:[%s226 + $0x4] sm:$0xf]
        %v229 = vld [vmem:[%s226 + $0x8] sm:$0xf]
        %v230 = vld [vmem:[%s226 + $0xc] sm:$0xf]
        %v231 = vld [vmem:[%s226 + $0x10] sm:$0xf]
        %v232 = vld [vmem:[%s226 + $0x14] sm:$0xf]
        %v233 = vld [vmem:[%s226 + $0x18] sm:$0xf]
        %v234 = vld [vmem:[%s226 + $0x1c] sm:$0xf]
        %v235 = vld [vmem:[%s226 + $0x20] sm:$0xf]
        %v236 = vld [vmem:[%s226 + $0x24] sm:$0xf]
        %v237 = vld [vmem:[%s226 + $0x28] sm:$0xf]
        %v238 = vld [vmem:[%s226 + $0x2c] sm:$0xf]
        %v239 = vld [vmem:[%s226 + $0x30] sm:$0xf]
        %v240 = vld [vmem:[%s226 + $0x34] sm:$0xf]
        %v241 = vld [vmem:[%s226 + $0x38] sm:$0xf]
        %v242 = vld [vmem:[%s226 + $0x3c] sm:$0xf]
        %v243 = vld [vmem:[%s226 + $0x40] sm:$0xf]
        %v244 = vld [vmem:[%s226 + $0x44] sm:$0xf]
        %v245 = vld [vmem:[%s226 + $0x48] sm:$0xf]
        %v246 = vld [vmem:[%s226 + $0x4c] sm:$0xf]
        %v247 = vld [vmem:[%s226 + $0x50] sm:$0xf]
        %v248 = vld [vmem:[%s226 + $0x54] sm:$0xf]
        %v249 = vld [vmem:[%s226 + $0x58] sm:$0xf]
        %v250 = vld [vmem:[%s226 + $0x5c] sm:$0xf]
        %v251 = vld [vmem:[%s226 + $0x60] sm:$0xf]
        %v252 = vld [vmem:[%s226 + $0x64] sm:$0xf]
        %v253 = vld [vmem:[%s226 + $0x68] sm:$0xf]
        %v254 = vld [vmem:[%s226 + $0x6c] sm:$0xf]
        %v255 = vld [vmem:[%s226 + $0x70] sm:$0xf]
        %v256 = vld [vmem:[%s226 + $0x74] sm:$0xf]
        %v257 = vld [vmem:[%s226 + $0x78] sm:$0xf]
        %v258 = vld [vmem:[%s226 + $0x7c] sm:$0xf]
        %s259 = scalar_lea.vmem %s1, 4
        %v260 = vld [vmem:[%s259] sm:$0xf]
        %v293 = vunpack.c.l.b16 %v227
        %v294 = vunpack.c.l.b16 %v228
        %v295 = vunpack.c.l.b16 %v229
        %v296 = vunpack.c.l.b16 %v230
        %v297 = vunpack.c.l.b16 %v231
        %v298 = vunpack.c.l.b16 %v232
        %v299 = vunpack.c.l.b16 %v233
        %v300 = vunpack.c.l.b16 %v234
        %v301 = vunpack.c.l.b16 %v235
        %v302 = vunpack.c.l.b16 %v236
        %v303 = vunpack.c.l.b16 %v237
        %v304 = vunpack.c.l.b16 %v238
        %v305 = vunpack.c.l.b16 %v239
        %v306 = vunpack.c.l.b16 %v240
        %v307 = vunpack.c.l.b16 %v241
        %v308 = vunpack.c.l.b16 %v242
        %v309 = vunpack.c.l.b16 %v243
        %v310 = vunpack.c.l.b16 %v244
        %v311 = vunpack.c.l.b16 %v245
        %v312 = vunpack.c.l.b16 %v246
        %v313 = vunpack.c.l.b16 %v247
        %v314 = vunpack.c.l.b16 %v248
        %v315 = vunpack.c.l.b16 %v249
        %v316 = vunpack.c.l.b16 %v250
        %v317 = vunpack.c.l.b16 %v251
        %v318 = vunpack.c.l.b16 %v252
        %v319 = vunpack.c.l.b16 %v253
        %v320 = vunpack.c.l.b16 %v254
        %v321 = vunpack.c.l.b16 %v255
        %v322 = vunpack.c.l.b16 %v256
        %v323 = vunpack.c.l.b16 %v257
        %v324 = vunpack.c.l.b16 %v258
        %v325 = vpack.c.b16 %v294, %v293
        %v326 = vpack.c.b16 %v296, %v295
        %v327 = vpack.c.b16 %v298, %v297
        %v328 = vpack.c.b16 %v300, %v299
        %v329 = vpack.c.b16 %v302, %v301
        %v330 = vpack.c.b16 %v304, %v303
        %v331 = vpack.c.b16 %v306, %v305
        %v332 = vpack.c.b16 %v308, %v307
        %v333 = vpack.c.b16 %v310, %v309
        %v334 = vpack.c.b16 %v312, %v311
        %v335 = vpack.c.b16 %v314, %v313
        %v336 = vpack.c.b16 %v316, %v315
        %v337 = vpack.c.b16 %v318, %v317
        %v338 = vpack.c.b16 %v320, %v319
        %v339 = vpack.c.b16 %v322, %v321
        %v340 = vpack.c.b16 %v324, %v323
        %vm341 = vcmask 97280
        %v343 = vsel %vm341, %v260, 0
        %v346 = vsel %vm341, %v325, 0
        %v349 = vsel %vm341, %v326, 0
        %v352 = vsel %vm341, %v327, 0
        %v355 = vsel %vm341, %v328, 0
        %v358 = vsel %vm341, %v329, 0
        %v361 = vsel %vm341, %v330, 0
        %v364 = vsel %vm341, %v331, 0
        %v367 = vsel %vm341, %v332, 0
        %v370 = vsel %vm341, %v333, 0
        %v373 = vsel %vm341, %v334, 0
        %v376 = vsel %vm341, %v335, 0
        %v379 = vsel %vm341, %v336, 0
        %v382 = vsel %vm341, %v337, 0
        %v385 = vsel %vm341, %v338, 0
        %v388 = vsel %vm341, %v339, 0
        %v391 = vsel %vm341, %v340, 0
        %393 = vmatpush.bf16.xpose.msra.mxu0 %v367
        %394 = vmatpush.bf16.xpose.msra.mxu0 %v364
        %395 = vmatpush.bf16.xpose.msra.mxu0 %v361
        %396 = vmatpush.bf16.xpose.msra.mxu0 %v358
        %397 = vmatpush.bf16.xpose.msra.mxu0 %v355
        %398 = vmatpush.bf16.xpose.msra.mxu0 %v352
        %399 = vmatpush.bf16.xpose.msra.mxu0 %v349
        %400 = vmatpush.bf16.xpose.msra.mxu0 %v346
        %401 = vmatmul.bf16.gmra.mxu0 %v343
        %v402 = vpop.f32.mrf.mxu0
        %v403 = vadd.f32 0.0, %v402
        %v404 = vpop.f32.mrf.mxu0
        %405 = vdwg.mxu0
        %406 = vmatpush.bf16.xpose.msra.mxu0 %v391
        %407 = vmatpush.bf16.xpose.msra.mxu0 %v388
        %408 = vmatpush.bf16.xpose.msra.mxu0 %v385
        %409 = vmatpush.bf16.xpose.msra.mxu0 %v382
        %410 = vmatpush.bf16.xpose.msra.mxu0 %v379
        %411 = vmatpush.bf16.xpose.msra.mxu0 %v376
        %412 = vmatpush.bf16.xpose.msra.mxu0 %v373
        %413 = vmatpush.bf16.xpose.msra.mxu0 %v370
        %414 = vmatmul.bf16.gmra.mxu0 %v343
        %v415 = vpop.f32.mrf.mxu0
        %v416 = vadd.f32 0.0, %v415
        %v417 = vpop.f32.mrf.mxu0
        %418 = vdwg.mxu0
        %v451 = vunpack.c.l.b16 %v189
        %v452 = vunpack.c.l.b16 %v190
        %v453 = vunpack.c.l.b16 %v191
        %v454 = vunpack.c.l.b16 %v192
        %v455 = vunpack.c.l.b16 %v193
        %v456 = vunpack.c.l.b16 %v194
        %v457 = vunpack.c.l.b16 %v195
        %v458 = vunpack.c.l.b16 %v196
        %v459 = vunpack.c.l.b16 %v197
        %v460 = vunpack.c.l.b16 %v198
        %v461 = vunpack.c.l.b16 %v199
        %v462 = vunpack.c.l.b16 %v200
        %v463 = vunpack.c.l.b16 %v201
        %v464 = vunpack.c.l.b16 %v202
        %v465 = vunpack.c.l.b16 %v203
        %v466 = vunpack.c.l.b16 %v204
        %v467 = vunpack.c.l.b16 %v205
        %v468 = vunpack.c.l.b16 %v206
        %v469 = vunpack.c.l.b16 %v207
        %v470 = vunpack.c.l.b16 %v208
        %v471 = vunpack.c.l.b16 %v209
        %v472 = vunpack.c.l.b16 %v210
        %v473 = vunpack.c.l.b16 %v211
        %v474 = vunpack.c.l.b16 %v212
        %v475 = vunpack.c.l.b16 %v213
        %v476 = vunpack.c.l.b16 %v214
        %v477 = vunpack.c.l.b16 %v215
        %v478 = vunpack.c.l.b16 %v216
        %v479 = vunpack.c.l.b16 %v217
        %v480 = vunpack.c.l.b16 %v218
        %v481 = vunpack.c.l.b16 %v219
        %v482 = vunpack.c.l.b16 %v220
        %v483 = vpack.c.b16 %v452, %v451
        %v484 = vpack.c.b16 %v454, %v453
        %v485 = vpack.c.b16 %v456, %v455
        %v486 = vpack.c.b16 %v458, %v457
        %v487 = vpack.c.b16 %v460, %v459
        %v488 = vpack.c.b16 %v462, %v461
        %v489 = vpack.c.b16 %v464, %v463
        %v490 = vpack.c.b16 %v466, %v465
        %v491 = vpack.c.b16 %v468, %v467
        %v492 = vpack.c.b16 %v470, %v469
        %v493 = vpack.c.b16 %v472, %v471
        %v494 = vpack.c.b16 %v474, %v473
        %v495 = vpack.c.b16 %v476, %v475
        %v496 = vpack.c.b16 %v478, %v477
        %v497 = vpack.c.b16 %v480, %v479
        %v498 = vpack.c.b16 %v482, %v481
        %v500 = vsel %vm341, %v221, 0
        %v503 = vsel %vm341, %v483, 0
        %v506 = vsel %vm341, %v484, 0
        %v509 = vsel %vm341, %v485, 0
        %v512 = vsel %vm341, %v486, 0
        %v515 = vsel %vm341, %v487, 0
        %v518 = vsel %vm341, %v488, 0
        %v521 = vsel %vm341, %v489, 0
        %v524 = vsel %vm341, %v490, 0
        %v527 = vsel %vm341, %v491, 0
        %v530 = vsel %vm341, %v492, 0
        %v533 = vsel %vm341, %v493, 0
        %v536 = vsel %vm341, %v494, 0
        %v539 = vsel %vm341, %v495, 0
        %v542 = vsel %vm341, %v496, 0
        %v545 = vsel %vm341, %v497, 0
        %v548 = vsel %vm341, %v498, 0
        %550 = vmatpush.bf16.xpose.msra.mxu0 %v524
        %551 = vmatpush.bf16.xpose.msra.mxu0 %v521
        %552 = vmatpush.bf16.xpose.msra.mxu0 %v518
        %553 = vmatpush.bf16.xpose.msra.mxu0 %v515
        %554 = vmatpush.bf16.xpose.msra.mxu0 %v512
        %555 = vmatpush.bf16.xpose.msra.mxu0 %v509
        %556 = vmatpush.bf16.xpose.msra.mxu0 %v506
        %557 = vmatpush.bf16.xpose.msra.mxu0 %v503
        %558 = vmatmul.bf16.gmra.mxu0 %v500
        %v559 = vpop.f32.mrf.mxu0
        %v560 = vadd.f32 %v403, %v559
        %v561 = vpop.f32.mrf.mxu0
        %562 = vdwg.mxu0
        %563 = vmatpush.bf16.xpose.msra.mxu0 %v548
        %564 = vmatpush.bf16.xpose.msra.mxu0 %v545
        %565 = vmatpush.bf16.xpose.msra.mxu0 %v542
        %566 = vmatpush.bf16.xpose.msra.mxu0 %v539
        %567 = vmatpush.bf16.xpose.msra.mxu0 %v536
        %568 = vmatpush.bf16.xpose.msra.mxu0 %v533
        %569 = vmatpush.bf16.xpose.msra.mxu0 %v530
        %570 = vmatpush.bf16.xpose.msra.mxu0 %v527
        %571 = vmatmul.bf16.gmra.mxu0 %v500
        %v572 = vpop.f32.mrf.mxu0
        %v573 = vadd.f32 %v416, %v572
        %v574 = vpop.f32.mrf.mxu0
        %575 = vdwg.mxu0
        %s576 = sadd.s32 %s184, 32
        %s577 = sshra.s32 %s576, 3
        %s578 = sand.u32 %s576, 7
        %s579 = smul.addr %s577, 4
        %s580 = scalar_lea.vmem %s182, %s579
        %v581 = vld [vmem:[%s580] sm:$0xf]
        %v582 = vld [vmem:[%s580 + $0x4] sm:$0xf]
        %v583 = vld [vmem:[%s580 + $0x8] sm:$0xf]
        %v584 = vld [vmem:[%s580 + $0xc] sm:$0xf]
        %v585 = vld [vmem:[%s580 + $0x10] sm:$0xf]
        %v586 = vld [vmem:[%s580 + $0x14] sm:$0xf]
        %v587 = vld [vmem:[%s580 + $0x18] sm:$0xf]
        %v588 = vld [vmem:[%s580 + $0x1c] sm:$0xf]
        %v589 = vld [vmem:[%s580 + $0x20] sm:$0xf]
        %v590 = vld [vmem:[%s580 + $0x24] sm:$0xf]
        %v591 = vld [vmem:[%s580 + $0x28] sm:$0xf]
        %v592 = vld [vmem:[%s580 + $0x2c] sm:$0xf]
        %v593 = vld [vmem:[%s580 + $0x30] sm:$0xf]
        %v594 = vld [vmem:[%s580 + $0x34] sm:$0xf]
        %v595 = vld [vmem:[%s580 + $0x38] sm:$0xf]
        %v596 = vld [vmem:[%s580 + $0x3c] sm:$0xf]
        %v597 = vld [vmem:[%s580 + $0x40] sm:$0xf]
        %v598 = vld [vmem:[%s580 + $0x44] sm:$0xf]
        %v599 = vld [vmem:[%s580 + $0x48] sm:$0xf]
        %v600 = vld [vmem:[%s580 + $0x4c] sm:$0xf]
        %v601 = vld [vmem:[%s580 + $0x50] sm:$0xf]
        %v602 = vld [vmem:[%s580 + $0x54] sm:$0xf]
        %v603 = vld [vmem:[%s580 + $0x58] sm:$0xf]
        %v604 = vld [vmem:[%s580 + $0x5c] sm:$0xf]
        %v605 = vld [vmem:[%s580 + $0x60] sm:$0xf]
        %v606 = vld [vmem:[%s580 + $0x64] sm:$0xf]
        %v607 = vld [vmem:[%s580 + $0x68] sm:$0xf]
        %v608 = vld [vmem:[%s580 + $0x6c] sm:$0xf]
        %v609 = vld [vmem:[%s580 + $0x70] sm:$0xf]
        %v610 = vld [vmem:[%s580 + $0x74] sm:$0xf]
        %v611 = vld [vmem:[%s580 + $0x78] sm:$0xf]
        %v612 = vld [vmem:[%s580 + $0x7c] sm:$0xf]
        %s613 = scalar_lea.vmem %s1, 8
        %v614 = vld [vmem:[%s613] sm:$0xf]
        %v647 = vunpack.c.l.b16 %v581
        %v648 = vunpack.c.l.b16 %v582
        %v649 = vunpack.c.l.b16 %v583
        %v650 = vunpack.c.l.b16 %v584
        %v651 = vunpack.c.l.b16 %v585
        %v652 = vunpack.c.l.b16 %v586
        %v653 = vunpack.c.l.b16 %v587
        %v654 = vunpack.c.l.b16 %v588
        %v655 = vunpack.c.l.b16 %v589
        %v656 = vunpack.c.l.b16 %v590
        %v657 = vunpack.c.l.b16 %v591
        %v658 = vunpack.c.l.b16 %v592
        %v659 = vunpack.c.l.b16 %v593
        %v660 = vunpack.c.l.b16 %v594
        %v661 = vunpack.c.l.b16 %v595
        %v662 = vunpack.c.l.b16 %v596
        %v663 = vunpack.c.l.b16 %v597
        %v664 = vunpack.c.l.b16 %v598
        %v665 = vunpack.c.l.b16 %v599
        %v666 = vunpack.c.l.b16 %v600
        %v667 = vunpack.c.l.b16 %v601
        %v668 = vunpack.c.l.b16 %v602
        %v669 = vunpack.c.l.b16 %v603
        %v670 = vunpack.c.l.b16 %v604
        %v671 = vunpack.c.l.b16 %v605
        %v672 = vunpack.c.l.b16 %v606
        %v673 = vunpack.c.l.b16 %v607
        %v674 = vunpack.c.l.b16 %v608
        %v675 = vunpack.c.l.b16 %v609
        %v676 = vunpack.c.l.b16 %v610
        %v677 = vunpack.c.l.b16 %v611
        %v678 = vunpack.c.l.b16 %v612
        %v679 = vpack.c.b16 %v648, %v647
        %v680 = vpack.c.b16 %v650, %v649
        %v681 = vpack.c.b16 %v652, %v651
        %v682 = vpack.c.b16 %v654, %v653
        %v683 = vpack.c.b16 %v656, %v655
        %v684 = vpack.c.b16 %v658, %v657
        %v685 = vpack.c.b16 %v660, %v659
        %v686 = vpack.c.b16 %v662, %v661
        %v687 = vpack.c.b16 %v664, %v663
        %v688 = vpack.c.b16 %v666, %v665
        %v689 = vpack.c.b16 %v668, %v667
        %v690 = vpack.c.b16 %v670, %v669
        %v691 = vpack.c.b16 %v672, %v671
        %v692 = vpack.c.b16 %v674, %v673
        %v693 = vpack.c.b16 %v676, %v675
        %v694 = vpack.c.b16 %v678, %v677
        %v696 = vsel %vm341, %v614, 0
        %v699 = vsel %vm341, %v679, 0
        %v702 = vsel %vm341, %v680, 0
        %v705 = vsel %vm341, %v681, 0
        %v708 = vsel %vm341, %v682, 0
        %v711 = vsel %vm341, %v683, 0
        %v714 = vsel %vm341, %v684, 0
        %v717 = vsel %vm341, %v685, 0
        %v720 = vsel %vm341, %v686, 0
        %v723 = vsel %vm341, %v687, 0
        %v726 = vsel %vm341, %v688, 0
        %v729 = vsel %vm341, %v689, 0
        %v732 = vsel %vm341, %v690, 0
        %v735 = vsel %vm341, %v691, 0
        %v738 = vsel %vm341, %v692, 0
        %v741 = vsel %vm341, %v693, 0
        %v744 = vsel %vm341, %v694, 0
        %746 = vmatpush.bf16.xpose.msra.mxu0 %v720
        %747 = vmatpush.bf16.xpose.msra.mxu0 %v717
        %748 = vmatpush.bf16.xpose.msra.mxu0 %v714
        %749 = vmatpush.bf16.xpose.msra.mxu0 %v711
        %750 = vmatpush.bf16.xpose.msra.mxu0 %v708
        %751 = vmatpush.bf16.xpose.msra.mxu0 %v705
        %752 = vmatpush.bf16.xpose.msra.mxu0 %v702
        %753 = vmatpush.bf16.xpose.msra.mxu0 %v699
        %754 = vmatmul.bf16.gmra.mxu0 %v696
        %v755 = vpop.f32.mrf.mxu0
        %v756 = vadd.f32 0.0, %v755
        %v757 = vpop.f32.mrf.mxu0
        %758 = vdwg.mxu0
        %759 = vmatpush.bf16.xpose.msra.mxu0 %v744
        %760 = vmatpush.bf16.xpose.msra.mxu0 %v741
        %761 = vmatpush.bf16.xpose.msra.mxu0 %v738
        %762 = vmatpush.bf16.xpose.msra.mxu0 %v735
        %763 = vmatpush.bf16.xpose.msra.mxu0 %v732
        %764 = vmatpush.bf16.xpose.msra.mxu0 %v729
        %765 = vmatpush.bf16.xpose.msra.mxu0 %v726
        %766 = vmatpush.bf16.xpose.msra.mxu0 %v723
        %767 = vmatmul.bf16.gmra.mxu0 %v696
        %v768 = vpop.f32.mrf.mxu0
        %v769 = vadd.f32 0.0, %v768
        %v770 = vpop.f32.mrf.mxu0
        %771 = vdwg.mxu0
        %v772 = vadd.f32 %v560, %v756
        %v773 = vadd.f32 %v573, %v769
        %v774 = vld [vmem:[%s2] sm:$0xff]
        %776 = vset.pattern.permute.xlu0 0
        %777 = vperm.xlu0 %776, %v774
        %v778 = vpop.permute.xlu0 %777
        %v780 = vadd.f32 %v772, %v778
        %v781 = vadd.f32 %v773, %v778
        %v782 = vmax.f32 %v780, 0.0
        %v783 = vmax.f32 %v781, 0.0
        %v784 = vpack.c.bf16 %v783, %v782
        %785 = vst [vmem:[%s177] sm:$0xff] %v784
        %s786 = sand.u32 %s107, 1
        %s787 = scalar_lea.sflag [#allocation3], %s786
        %s788 = sand.u32 %s107, 1
        %s789 = smul.addr %s788, 8
        %s790 = scalar_lea.vmem [#allocation2], %s789
        // Predicated region
        $region33: #{tpu_custom_call.1} parent=31 // pred_check
          %p791 = pneg %p117
        $region34: #{tpu_custom_call.1} parent=31 // pred_check_branch
          %793 = sbr.rel (%p791) target = $region36
        $region35: #{tpu_custom_call.1} parent=31 // pred_region
          %s794 = smul.u32 2, %s22
          %796 = vsyncadd %s787, 0
          %s797 = smul.addr %s21, 2
          %s798 = sadd.s32 %s794, %s797
          %s799 = smul.addr %s798, 4
          %s800 = scalar_lea.hbm %s3, %s799
          %s802 = sshll.u32 %s790, 4
          %s803 = int_to_ptr.vmem [resolvable:$true] %s802
          %s804 = sshll.u32 %s800, 4
          %s805 = int_to_ptr.hbm [resolvable:$true] %s804
          %807 = dma.vmem_to_hbm [thread:$0]  %s803, 128, %s805, %s787
        $region36: #{tpu_custom_call.1} parent=31 // pred_fallthru
          _
      $region32: #{tpu_custom_call.1} parent=5 // pred_fallthru
        _
      %p808 = scmp.le.s32.totalorder 2, %s12
      // Predicated region
      $region37: #{tpu_custom_call.1} parent=5 // pred_check
        %p809 = pneg %p808
      $region38: #{tpu_custom_call.1} parent=5 // pred_check_branch
        %811 = sbr.rel (%p809) target = $region40
      $region39: #{tpu_custom_call.1} parent=5 // pred_region
        %s812 = ssub.s32 %s12, 2
        // Predicated region
        $region41: #{tpu_custom_call.1} parent=39 // pred_check
          %p813 = pneg %p123
        $region42: #{tpu_custom_call.1} parent=39 // pred_check_branch
          %815 = sbr.rel (%p813) target = $region44
        $region43: #{tpu_custom_call.1} parent=39 // pred_region
          %s816 = sand.u32 %s108, 1
          %s817 = scalar_lea.sflag [#allocation3], %s816
          %s818 = sand.u32 %s108, 1
          %s819 = smul.addr %s818, 8
          %s820 = scalar_lea.vmem [#allocation2], %s819
          %822 = dma.done %s817, 128
        $region44: #{tpu_custom_call.1} parent=39 // pred_fallthru
          _
      $region40: #{tpu_custom_call.1} parent=5 // pred_fallthru
        _
    $region6: #{tpu_custom_call.1} parent=1 // loop_footer
      %s16 = sadd.s32 1, %s12
    $region7: #{tpu_custom_call.1} parent=1 // loop_footer_branch
      %11 = sbr.rel target = $region3
    $region8: #{tpu_custom_call.1} parent=1 // loop_exit
      _
    %823 = vsyncpa [#allocation3], 1
    %s824 = scalar_lea.sflag [#allocation3], 1
    %825 = vsyncpa %s824, 1

</llo_original>
